<compile_context>
chip_gen: v7x
topology: tpu7x:2x2x1
jax: 0.10.0
libtpu: 0.0.40
codegen_flags: <defaults>
</compile_context>

<pallas_src>
import functools

import jax
import jax.numpy as jnp
from jax import lax
from jax.experimental import pallas as pl
from jax.experimental.pallas import tpu as pltpu

EPS = 1e-5


def _spatial_tile(hw):
    """Largest lane tile that divides H*W: a multiple of 128 capped at 2048,
    or the full H*W when it is small / has no 128-multiple divisor."""
    if hw <= 2048:
        return hw
    for m in range(16, 0, -1):
        t = m * 128
        if hw % t == 0:
            return t
    return hw


# ---------------------------------------------------------------------------
# Pass 1: conv1 (1x1) [+ fused downsample 1x1] on the MXU + per-block BN stats
# ---------------------------------------------------------------------------
def _k_conv1(x_ref, w1_ref, y1_ref, s1_ref, q1_ref):
    xb = x_ref[...].astype(jnp.bfloat16)
    y1 = jnp.dot(w1_ref[...], xb, preferred_element_type=jnp.float32)
    y1_ref[...] = y1.astype(y1_ref.dtype)
    s1_ref[...] = jnp.sum(y1, axis=-1, keepdims=True)
    q1_ref[...] = jnp.sum(y1 * y1, axis=-1, keepdims=True)


def _k_conv1_ds(x_ref, w1_ref, wd_ref,
                y1_ref, yd_ref, s1_ref, q1_ref, sd_ref, qd_ref):
    xb = x_ref[...].astype(jnp.bfloat16)
    y1 = jnp.dot(w1_ref[...], xb, preferred_element_type=jnp.float32)
    y1_ref[...] = y1.astype(y1_ref.dtype)
    s1_ref[...] = jnp.sum(y1, axis=-1, keepdims=True)
    q1_ref[...] = jnp.sum(y1 * y1, axis=-1, keepdims=True)
    yd = jnp.dot(wd_ref[...], xb, preferred_element_type=jnp.float32)
    yd_ref[...] = yd
    sd_ref[...] = jnp.sum(yd, axis=-1, keepdims=True)
    qd_ref[...] = jnp.sum(yd * yd, axis=-1, keepdims=True)


def _conv1_pass(x_flat, w1b, wdb=None):
    n, cin, hw = x_flat.shape
    c1 = w1b.shape[0]
    tile = _spatial_tile(hw)
    nt = hw // tile
    grid = (n, nt)

    x_spec = pl.BlockSpec((None, cin, tile), lambda i, j: (i, 0, j))
    w1_spec = pl.BlockSpec(w1b.shape, lambda i, j: (0, 0))
    y1_spec = pl.BlockSpec((None, c1, tile), lambda i, j: (i, 0, j))
    st1_spec = pl.BlockSpec((None, None, c1, 1), lambda i, j: (i, j, 0, 0))
    y1_shape = jax.ShapeDtypeStruct((n, c1, hw), jnp.bfloat16)
    st1_shape = jax.ShapeDtypeStruct((n, nt, c1, 1), jnp.float32)
    cparams = pltpu.CompilerParams(
        dimension_semantics=("parallel", "parallel"))

    if wdb is None:
        return pl.pallas_call(
            _k_conv1,
            grid_spec=pltpu.PrefetchScalarGridSpec(
                num_scalar_prefetch=0, grid=grid,
                in_specs=[x_spec, w1_spec],
                out_specs=(y1_spec, st1_spec, st1_spec)),
            out_shape=(y1_shape, st1_shape, st1_shape),
            compiler_params=cparams,
        )(x_flat, w1b)

    cd = wdb.shape[0]
    wd_spec = pl.BlockSpec(wdb.shape, lambda i, j: (0, 0))
    yd_spec = pl.BlockSpec((None, cd, tile), lambda i, j: (i, 0, j))
    std_spec = pl.BlockSpec((None, None, cd, 1), lambda i, j: (i, j, 0, 0))
    yd_shape = jax.ShapeDtypeStruct((n, cd, hw), jnp.float32)
    std_shape = jax.ShapeDtypeStruct((n, nt, cd, 1), jnp.float32)
    return pl.pallas_call(
        _k_conv1_ds,
        grid_spec=pltpu.PrefetchScalarGridSpec(
            num_scalar_prefetch=0, grid=grid,
            in_specs=[x_spec, w1_spec, wd_spec],
            out_specs=(y1_spec, yd_spec, st1_spec, st1_spec,
                       std_spec, std_spec)),
        out_shape=(y1_shape, yd_shape, st1_shape, st1_shape,
                   std_shape, std_shape),
        compiler_params=cparams,
    )(x_flat, w1b, wdb)


# ---------------------------------------------------------------------------
# Pass 2: BN1-apply + ReLU + 3x3 conv (K-stacked shifted matmuls, no im2col,
#         no HBM pad copy) + per-image BN2 partial stats.
# ---------------------------------------------------------------------------
def _k_conv3x3_stats(y1_ref, w2k_ref, sc_ref, sh_ref, cm_ref,
                     y2_ref, s2_ref, q2_ref, hpad_ref, *, W, d, HW):
    C = y1_ref.shape[0]
    Co = y2_ref.shape[0]
    S = d * W + d                     # max |flattened shift| = halo size

    # BN1-apply + ReLU exactly once per element (f32 math), one bf16 cast.
    h = jnp.maximum(y1_ref[...].astype(jnp.float32) * sc_ref[...]
                    + sh_ref[...], 0.0)
    hb = h.astype(jnp.bfloat16)

    # Zero-padded, row-shifted (K-stacked over ky) staging buffer in VMEM:
    # band ky holds hb shifted by (ky-1)*d*W lanes; halo lanes stay zero so
    # row-out-of-range taps contribute zero (= zero padding of the
    # normalized activation, as in the PyTorch conv).
    hpad_ref[...] = jnp.zeros_like(hpad_ref)
    for ky in range(3):
        lo = S - (ky - 1) * d * W
        hpad_ref[ky * C:(ky + 1) * C, lo:lo + HW] = hb

    acc = jnp.zeros((Co, HW), jnp.float32)
    for kx in range(3):
        a = S + (kx - 1) * d
        rhs = hpad_ref[:, a:a + HW]             # (3C, HW) bf16
        if kx != 1:
            # zero the lanes whose source column wrapped across a row edge
            rhs = rhs * cm_ref[kx]
        acc = acc + jnp.dot(w2k_ref[kx], rhs,
                            preferred_element_type=jnp.float32)

    y2_ref[...] = acc.astype(y2_ref.dtype)
    s2_ref[...] = jnp.sum(acc, axis=-1, keepdims=True)
    q2_ref[...] = jnp.sum(acc * acc, axis=-1, keepdims=True)


def _conv3x3_pass(y1_bf, w2k, sc1, sh1, cmask, *, W, d):
    n, c, hw = y1_bf.shape
    co = w2k.shape[1]
    S = d * W + d
    hwp = hw + 2 * S
    kernel = functools.partial(_k_conv3x3_stats, W=W, d=d, HW=hw)
    return pl.pallas_call(
        kernel,
        grid_spec=pltpu.PrefetchScalarGridSpec(
            num_scalar_prefetch=0, grid=(n,),
            in_specs=[
                pl.BlockSpec((None, c, hw), lambda i: (i, 0, 0)),
                pl.BlockSpec(w2k.shape, lambda i: (0, 0, 0)),
                pl.BlockSpec(sc1.shape, lambda i: (0, 0)),
                pl.BlockSpec(sh1.shape, lambda i: (0, 0)),
                pl.BlockSpec(cmask.shape, lambda i: (0, 0, 0)),
            ],
            out_specs=(
                pl.BlockSpec((None, co, hw), lambda i: (i, 0, 0)),
                pl.BlockSpec((None, co, 1), lambda i: (i, 0, 0)),
                pl.BlockSpec((None, co, 1), lambda i: (i, 0, 0)),
            ),
            scratch_shapes=[pltpu.VMEM((3 * c, hwp), jnp.bfloat16)]),
        out_shape=(jax.ShapeDtypeStruct((n, co, hw), jnp.bfloat16),
                   jax.ShapeDtypeStruct((n, co, 1), jnp.float32),
                   jax.ShapeDtypeStruct((n, co, 1), jnp.float32)),
        compiler_params=pltpu.CompilerParams(
            dimension_semantics=("parallel",)),
    )(y1_bf, w2k, sc1, sh1, cmask)


# ---------------------------------------------------------------------------
# Pass 3: BN2-apply + ReLU + conv3 (1x1) + per-block BN3 partial stats.
# ---------------------------------------------------------------------------
def _k_norm_conv1(x_ref, w_ref, sc_ref, sh_ref, y_ref, s_ref, q_ref):
    h = jnp.maximum(x_ref[...].astype(jnp.float32) * sc_ref[...]
                    + sh_ref[...], 0.0)
    y = jnp.dot(w_ref[...], h.astype(jnp.bfloat16),
                preferred_element_type=jnp.float32)
    y_ref[...] = y.astype(y_ref.dtype)
    s_ref[...] = jnp.sum(y, axis=-1, keepdims=True)
    q_ref[...] = jnp.sum(y * y, axis=-1, keepdims=True)


def _norm_conv1_pass(x_bf, wb, sc, sh):
    n, cin, hw = x_bf.shape
    co = wb.shape[0]
    tile = _spatial_tile(hw)
    nt = hw // tile
    grid = (n, nt)
    return pl.pallas_call(
        _k_norm_conv1,
        grid_spec=pltpu.PrefetchScalarGridSpec(
            num_scalar_prefetch=0, grid=grid,
            in_specs=[
                pl.BlockSpec((None, cin, tile), lambda i, j: (i, 0, j)),
                pl.BlockSpec(wb.shape, lambda i, j: (0, 0)),
                pl.BlockSpec(sc.shape, lambda i, j: (0, 0)),
                pl.BlockSpec(sh.shape, lambda i, j: (0, 0)),
            ],
            out_specs=(
                pl.BlockSpec((None, co, tile), lambda i, j: (i, 0, j)),
                pl.BlockSpec((None, None, co, 1), lambda i, j: (i, j, 0, 0)),
                pl.BlockSpec((None, None, co, 1), lambda i, j: (i, j, 0, 0)),
            )),
        out_shape=(jax.ShapeDtypeStruct((n, co, hw), jnp.float32),
                   jax.ShapeDtypeStruct((n, nt, co, 1), jnp.float32),
                   jax.ShapeDtypeStruct((n, nt, co, 1), jnp.float32)),
        compiler_params=pltpu.CompilerParams(
            dimension_semantics=("parallel", "parallel")),
    )(x_bf, wb, sc, sh)


# ---------------------------------------------------------------------------
# Pass 4: BN3-apply (+ downsample BN-apply) + residual add + ReLU.
# Pure elementwise, lane-dense blocks, fully parallel grid.
# ---------------------------------------------------------------------------
def _k_final_ds(y3_ref, yd_ref, sc3_ref, sh3_ref, scd_ref, shd_ref, o_ref):
    o_ref[...] = jnp.maximum(
        y3_ref[...] * sc3_ref[...] + sh3_ref[...]
        + yd_ref[...] * scd_ref[...] + shd_ref[...], 0.0)


def _k_final_id(y3_ref, xid_ref, sc3_ref, sh3_ref, o_ref):
    o_ref[...] = jnp.maximum(
        y3_ref[...] * sc3_ref[...] + sh3_ref[...] + xid_ref[...], 0.0)


def _finalize_pass(y3, sc3, sh3, iden, scd=None, shd=None):
    n, co, hw = y3.shape
    tile = _spatial_tile(hw)
    nt = hw // tile
    grid = (n, nt)
    blk = pl.BlockSpec((None, co, tile), lambda i, j: (i, 0, j))
    vec = pl.BlockSpec((co, 1), lambda i, j: (0, 0))
    out_shape = jax.ShapeDtypeStruct((n, co, hw), jnp.float32)
    cparams = pltpu.CompilerParams(
        dimension_semantics=("parallel", "parallel"))
    if scd is not None:
        return pl.pallas_call(
            _k_final_ds,
            grid_spec=pltpu.PrefetchScalarGridSpec(
                num_scalar_prefetch=0, grid=grid,
                in_specs=[blk, blk, vec, vec, vec, vec],
                out_specs=blk),
            out_shape=out_shape, compiler_params=cparams,
        )(y3, iden, sc3, sh3, scd, shd)
    return pl.pallas_call(
        _k_final_id,
        grid_spec=pltpu.PrefetchScalarGridSpec(
            num_scalar_prefetch=0, grid=grid,
            in_specs=[blk, blk, vec, vec],
            out_specs=blk),
        out_shape=out_shape, compiler_params=cparams,
    )(y3, iden, sc3, sh3)


# ---------------------------------------------------------------------------
# Wrapper glue
# ---------------------------------------------------------------------------
def _scale_shift(ssum, ssq, count, gamma, beta):
    """Per-channel BN (training mode, biased var) -> fused scale/shift."""
    mean = ssum / count
    var = jnp.maximum(ssq / count - mean * mean, 0.0)
    inv = lax.rsqrt(var + EPS)
    scale = (gamma.reshape(-1, 1) * inv).astype(jnp.float32)
    shift = (beta.reshape(-1, 1) - mean * scale).astype(jnp.float32)
    return scale, shift


def bottleneck_forward(x, params, *, stride=1, dilation=1, groups=1):
    # TODO(synk): stride > 1 (strided 3x3 + strided downsample) and
    # groups > 1 (grouped 3x3) are not implemented in the flattened layout.
    assert stride == 1 and groups == 1
    n, cin, h, w = x.shape
    hw = h * w
    d = dilation
    w1, g1, b1 = params["w1"], params["g1"], params["b1"]
    w2, g2, b2 = params["w2"], params["g2"], params["b2"]
    w3, g3, b3 = params["w3"], params["g3"], params["b3"]
    width = w1.shape[0]
    cout = w3.shape[0]
    has_ds = "wd" in params
    count = float(n * hw)

    # Free layout change: NCHW -> (N, C, H*W); spatial goes on MXU lanes.
    x_flat = x.reshape(n, cin, hw)

    # bf16 weights for the MXU (f32 accumulation in-kernel).
    w1b = w1.reshape(width, cin).astype(jnp.bfloat16)
    w3b = w3.reshape(cout, width).astype(jnp.bfloat16)
    # 3x3 weights K-stacked over ky per kx tap: w2k[kx][o, ky*C + i].
    w2k = jnp.transpose(w2, (3, 0, 2, 1)).reshape(3, width, 3 * width)
    w2k = w2k.astype(jnp.bfloat16)

    # pass 1: conv1 (1x1) [+ fused downsample conv] + partial BN stats
    if has_ds:
        wdb = params["wd"].reshape(cout, cin).astype(jnp.bfloat16)
        y1, yd, s1, q1, sd, qd = _conv1_pass(x_flat, w1b, wdb)
        scd, shd = _scale_shift(sd.sum(axis=(0, 1)), qd.sum(axis=(0, 1)),
                                count, params["gd"], params["bd"])
    else:
        y1, s1, q1 = _conv1_pass(x_flat, w1b)
    sc1, sh1 = _scale_shift(s1.sum(axis=(0, 1)), q1.sum(axis=(0, 1)),
                            count, g1, b1)

    # column-validity masks for the +/-d lane shifts of the 3x3 taps
    col = jnp.arange(hw, dtype=jnp.int32) % w
    cmask = jnp.stack([((col + dx >= 0) & (col + dx < w))
                       for dx in (-d, 0, d)])
    cmask = cmask.astype(jnp.bfloat16).reshape(3, 1, hw)

    # pass 2: bn1-apply + relu + conv2 (3x3) + partial BN2 stats
    y2, s2, q2 = _conv3x3_pass(y1, w2k, sc1, sh1, cmask, W=w, d=d)
    sc2, sh2 = _scale_shift(s2.sum(axis=0), q2.sum(axis=0), count, g2, b2)

    # pass 3: bn2-apply + relu + conv3 (1x1) + partial BN3 stats
    y3, s3, q3 = _norm_conv1_pass(y2, w3b, sc2, sh2)
    sc3, sh3 = _scale_shift(s3.sum(axis=(0, 1)), q3.sum(axis=(0, 1)),
                            count, g3, b3)

    # pass 4: bn3-apply (+ downsample bn-apply) + residual add + relu
    if has_ds:
        out = _finalize_pass(y3, sc3, sh3, yd, scd, shd)
    else:
        out = _finalize_pass(y3, sc3, sh3, x_flat)

    return out.reshape(n, cout, h, w)


# ---------------------------------------------------------------------------
# Pure-XLA reference (PyTorch training-mode forward).  Conv operands are cast
# to bf16 — the same MXU precision the kernels use.  The kernels additionally
# store the inner intermediates (y1, y2) in bf16 in HBM, so the comparison
# tolerance is a few x 1e-2.
# ---------------------------------------------------------------------------
def bottleneck_reference(x, params, *, stride=1, dilation=1):
    def conv(x, w, s=1, pad=0, dil=1):
        return lax.conv_general_dilated(
            x.astype(jnp.bfloat16), w.astype(jnp.bfloat16), (s, s),
            [(pad, pad), (pad, pad)], rhs_dilation=(dil, dil),
            dimension_numbers=("NCHW", "OIHW", "NCHW"),
            preferred_element_type=jnp.float32)

    def bn(x, g, b):
        m = x.mean(axis=(0, 2, 3), keepdims=True)
        v = ((x - m) ** 2).mean(axis=(0, 2, 3), keepdims=True)
        return (x - m) / jnp.sqrt(v + EPS) * g.reshape(1, -1, 1, 1) \
            + b.reshape(1, -1, 1, 1)

    out = jnp.maximum(bn(conv(x, params["w1"]), params["g1"], params["b1"]),
                      0.0)
    out = jnp.maximum(
        bn(conv(out, params["w2"], s=stride, pad=dilation, dil=dilation),
           params["g2"], params["b2"]), 0.0)
    out = bn(conv(out, params["w3"]), params["g3"], params["b3"])
    if "wd" in params:
        iden = bn(conv(x, params["wd"], s=stride), params["gd"], params["bd"])
    else:
        iden = x
    return jnp.maximum(out + iden, 0.0)


def _make_params(key, inplanes, planes, *, groups=1, base_width=64,
                 with_downsample=True):
    width = int(planes * (base_width / 64.0)) * groups
    outc = planes  # expansion = 1
    ks = jax.random.split(key, 13)
    p = {
        "w1": 0.2 * jax.random.normal(ks[0], (width, inplanes, 1, 1), jnp.float32),
        "g1": 1.0 + 0.1 * jax.random.normal(ks[1], (width,), jnp.float32),
        "b1": 0.1 * jax.random.normal(ks[2], (width,), jnp.float32),
        "w2": 0.1 * jax.random.normal(ks[3], (width, width // groups, 3, 3), jnp.float32),
        "g2": 1.0 + 0.1 * jax.random.normal(ks[4], (width,), jnp.float32),
        "b2": 0.1 * jax.random.normal(ks[5], (width,), jnp.float32),
        "w3": 0.2 * jax.random.normal(ks[6], (outc, width, 1, 1), jnp.float32),
        "g3": 1.0 + 0.1 * jax.random.normal(ks[7], (outc,), jnp.float32),
        "b3": 0.1 * jax.random.normal(ks[8], (outc,), jnp.float32),
    }
    if with_downsample:
        p["wd"] = 0.2 * jax.random.normal(ks[9], (outc, inplanes, 1, 1), jnp.float32)
        p["gd"] = 1.0 + 0.1 * jax.random.normal(ks[10], (outc,), jnp.float32)
        p["bd"] = 0.1 * jax.random.normal(ks[11], (outc,), jnp.float32)
    return p


if __name__ == "__main__":
    key = jax.random.PRNGKey(0)
    k_x1, k_p1, k_x2, k_p2 = jax.random.split(key, 4)

    # Case 1: Bottleneck(inplanes=4, planes=8) -> downsample branch active.
    N, inplanes, H, W = 2, 4, 16, 16
    planes = 8
    x1 = jax.random.normal(k_x1, (N, inplanes, H, W), jnp.float32)
    p1 = _make_params(k_p1, inplanes, planes, with_downsample=True)

    out1 = jax.block_until_ready(bottleneck_forward(x1, p1))
    ref1 = bottleneck_reference(x1, p1)
    assert out1.shape == ref1.shape, (out1.shape, ref1.shape)
    err1 = float(jnp.max(jnp.abs(out1 - ref1)))
    assert jnp.allclose(out1, ref1, atol=2.5e-2, rtol=2.5e-2), err1

    # Case 2: Bottleneck(inplanes=8, planes=8) -> identity shortcut.
    x2 = jax.random.normal(k_x2, (N, planes, H, W), jnp.float32)
    p2 = _make_params(k_p2, planes, planes, with_downsample=False)

    out2 = jax.block_until_ready(bottleneck_forward(x2, p2))
    ref2 = bottleneck_reference(x2, p2)
    assert out2.shape == ref2.shape, (out2.shape, ref2.shape)
    err2 = float(jnp.max(jnp.abs(out2 - ref2)))
    assert jnp.allclose(out2, ref2, atol=2.5e-2, rtol=2.5e-2), err2

    print("KERNEL_OK")
</pallas_src>

<mosaic_0001>
module attributes {stable_mosaic.version = 11 : i64} {
  func.func @_k_conv1_ds(%arg0: i32, %arg1: i32, %arg2: memref<1x4x256xf32, #tpu.memory_space<vmem>>, %arg3: memref<8x4xbf16, #tpu.memory_space<vmem>>, %arg4: memref<8x4xbf16, #tpu.memory_space<vmem>>, %arg5: memref<1x8x256xbf16, #tpu.memory_space<vmem>>, %arg6: memref<1x8x256xf32, #tpu.memory_space<vmem>>, %arg7: memref<1x1x8x1xf32, #tpu.memory_space<vmem>>, %arg8: memref<1x1x8x1xf32, #tpu.memory_space<vmem>>, %arg9: memref<1x1x8x1xf32, #tpu.memory_space<vmem>>, %arg10: memref<1x1x8x1xf32, #tpu.memory_space<vmem>>) attributes {dimension_semantics = [#tpu.dimension_semantics<parallel>, #tpu.dimension_semantics<parallel>], iteration_bounds = array<i64: 2, 1>, scalar_prefetch = 0 : i64, scratch_operands = 0 : i64, tpu.core_type = #tpu.core_type<tc>, window_params = [{transform_indices = @transform_0, window_bounds = array<i64: 1, 4, 256>}, {pipeline_mode = #tpu.pipeline_mode<synchronous>, transform_indices = @transform_1, window_bounds = array<i64: 8, 4>}, {pipeline_mode = #tpu.pipeline_mode<synchronous>, transform_indices = @transform_2, window_bounds = array<i64: 8, 4>}, {transform_indices = @transform_3, window_bounds = array<i64: 1, 8, 256>}, {transform_indices = @transform_4, window_bounds = array<i64: 1, 8, 256>}, {transform_indices = @transform_5, window_bounds = array<i64: 1, 1, 8, 1>}, {transform_indices = @transform_6, window_bounds = array<i64: 1, 1, 8, 1>}, {transform_indices = @transform_7, window_bounds = array<i64: 1, 1, 8, 1>}, {transform_indices = @transform_8, window_bounds = array<i64: 1, 1, 8, 1>}]} {
    %c0 = arith.constant 0 : index
    %c0_0 = arith.constant 0 : index
    %c0_1 = arith.constant 0 : index
    %0 = vector.load %arg2[%c0, %c0_0, %c0_1] : memref<1x4x256xf32, #tpu.memory_space<vmem>>, vector<1x4x256xf32>
    %1 = vector.shape_cast %0 : vector<1x4x256xf32> to vector<4x256xf32>
    %2 = arith.truncf %1 : vector<4x256xf32> to vector<4x256xbf16>
    %c0_2 = arith.constant 0 : index
    %c0_3 = arith.constant 0 : index
    %3 = vector.load %arg3[%c0_2, %c0_3] : memref<8x4xbf16, #tpu.memory_space<vmem>>, vector<8x4xbf16>
    %cst = arith.constant dense<0.000000e+00> : vector<8x256xf32>
    %4 = tpu.matmul %3, %2, %cst {dimension_numbers = #tpu.dot_dimension_numbers<[1], [0], [0], [1], [0, 0, 1, 1], [], []>} : vector<8x4xbf16>, vector<4x256xbf16>, vector<8x256xf32> -> vector<8x256xf32>
    %5 = arith.truncf %4 : vector<8x256xf32> to vector<8x256xbf16>
    %c0_4 = arith.constant 0 : index
    %c0_5 = arith.constant 0 : index
    %c0_6 = arith.constant 0 : index
    %6 = vector.load %arg5[%c0_4, %c0_5, %c0_6] : memref<1x8x256xbf16, #tpu.memory_space<vmem>>, vector<1x8x256xbf16>
    %7 = vector.shape_cast %6 : vector<1x8x256xbf16> to vector<8x256xbf16>
    %8 = vector.shape_cast %5 : vector<8x256xbf16> to vector<1x8x256xbf16>
    tpu.vector_store %arg5[%c0_4, %c0_5, %c0_6], %8 {strides = array<i32>} : memref<1x8x256xbf16, #tpu.memory_space<vmem>>, vector<1x8x256xbf16>,
    %cst_7 = arith.constant dense<0.000000e+00> : vector<8xf32>
    %9 = vector.multi_reduction <add>, %4, %cst_7 [1] : vector<8x256xf32> to vector<8xf32>
    %10 = vector.shape_cast %9 : vector<8xf32> to vector<8x1xf32>
    %c0_8 = arith.constant 0 : index
    %c0_9 = arith.constant 0 : index
    %c0_10 = arith.constant 0 : index
    %c0_11 = arith.constant 0 : index
    %11 = vector.load %arg7[%c0_8, %c0_9, %c0_10, %c0_11] : memref<1x1x8x1xf32, #tpu.memory_space<vmem>>, vector<1x1x8x1xf32>
    %12 = vector.shape_cast %11 : vector<1x1x8x1xf32> to vector<8x1xf32>
    %13 = vector.shape_cast %10 : vector<8x1xf32> to vector<1x1x8x1xf32>
    tpu.vector_store %arg7[%c0_8, %c0_9, %c0_10, %c0_11], %13 {strides = array<i32>} : memref<1x1x8x1xf32, #tpu.memory_space<vmem>>, vector<1x1x8x1xf32>,
    %14 = arith.mulf %4, %4 : vector<8x256xf32>
    %cst_12 = arith.constant dense<0.000000e+00> : vector<8xf32>
    %15 = vector.multi_reduction <add>, %14, %cst_12 [1] : vector<8x256xf32> to vector<8xf32>
    %16 = vector.shape_cast %15 : vector<8xf32> to vector<8x1xf32>
    %c0_13 = arith.constant 0 : index
    %c0_14 = arith.constant 0 : index
    %c0_15 = arith.constant 0 : index
    %c0_16 = arith.constant 0 : index
    %17 = vector.load %arg8[%c0_13, %c0_14, %c0_15, %c0_16] : memref<1x1x8x1xf32, #tpu.memory_space<vmem>>, vector<1x1x8x1xf32>
    %18 = vector.shape_cast %17 : vector<1x1x8x1xf32> to vector<8x1xf32>
    %19 = vector.shape_cast %16 : vector<8x1xf32> to vector<1x1x8x1xf32>
    tpu.vector_store %arg8[%c0_13, %c0_14, %c0_15, %c0_16], %19 {strides = array<i32>} : memref<1x1x8x1xf32, #tpu.memory_space<vmem>>, vector<1x1x8x1xf32>,
    %c0_17 = arith.constant 0 : index
    %c0_18 = arith.constant 0 : index
    %20 = vector.load %arg4[%c0_17, %c0_18] : memref<8x4xbf16, #tpu.memory_space<vmem>>, vector<8x4xbf16>
    %cst_19 = arith.constant dense<0.000000e+00> : vector<8x256xf32>
    %21 = tpu.matmul %20, %2, %cst_19 {dimension_numbers = #tpu.dot_dimension_numbers<[1], [0], [0], [1], [0, 0, 1, 1], [], []>} : vector<8x4xbf16>, vector<4x256xbf16>, vector<8x256xf32> -> vector<8x256xf32>
    %c0_20 = arith.constant 0 : index
    %c0_21 = arith.constant 0 : index
    %c0_22 = arith.constant 0 : index
    %22 = vector.load %arg6[%c0_20, %c0_21, %c0_22] : memref<1x8x256xf32, #tpu.memory_space<vmem>>, vector<1x8x256xf32>
    %23 = vector.shape_cast %22 : vector<1x8x256xf32> to vector<8x256xf32>
    %24 = vector.shape_cast %21 : vector<8x256xf32> to vector<1x8x256xf32>
    tpu.vector_store %arg6[%c0_20, %c0_21, %c0_22], %24 {strides = array<i32>} : memref<1x8x256xf32, #tpu.memory_space<vmem>>, vector<1x8x256xf32>,
    %cst_23 = arith.constant dense<0.000000e+00> : vector<8xf32>
    %25 = vector.multi_reduction <add>, %21, %cst_23 [1] : vector<8x256xf32> to vector<8xf32>
    %26 = vector.shape_cast %25 : vector<8xf32> to vector<8x1xf32>
    %c0_24 = arith.constant 0 : index
    %c0_25 = arith.constant 0 : index
    %c0_26 = arith.constant 0 : index
    %c0_27 = arith.constant 0 : index
    %27 = vector.load %arg9[%c0_24, %c0_25, %c0_26, %c0_27] : memref<1x1x8x1xf32, #tpu.memory_space<vmem>>, vector<1x1x8x1xf32>
    %28 = vector.shape_cast %27 : vector<1x1x8x1xf32> to vector<8x1xf32>
    %29 = vector.shape_cast %26 : vector<8x1xf32> to vector<1x1x8x1xf32>
    tpu.vector_store %arg9[%c0_24, %c0_25, %c0_26, %c0_27], %29 {strides = array<i32>} : memref<1x1x8x1xf32, #tpu.memory_space<vmem>>, vector<1x1x8x1xf32>,
    %30 = arith.mulf %21, %21 : vector<8x256xf32>
    %cst_28 = arith.constant dense<0.000000e+00> : vector<8xf32>
    %31 = vector.multi_reduction <add>, %30, %cst_28 [1] : vector<8x256xf32> to vector<8xf32>
    %32 = vector.shape_cast %31 : vector<8xf32> to vector<8x1xf32>
    %c0_29 = arith.constant 0 : index
    %c0_30 = arith.constant 0 : index
    %c0_31 = arith.constant 0 : index
    %c0_32 = arith.constant 0 : index
    %33 = vector.load %arg10[%c0_29, %c0_30, %c0_31, %c0_32] : memref<1x1x8x1xf32, #tpu.memory_space<vmem>>, vector<1x1x8x1xf32>
    %34 = vector.shape_cast %33 : vector<1x1x8x1xf32> to vector<8x1xf32>
    %35 = vector.shape_cast %32 : vector<8x1xf32> to vector<1x1x8x1xf32>
    tpu.vector_store %arg10[%c0_29, %c0_30, %c0_31, %c0_32], %35 {strides = array<i32>} : memref<1x1x8x1xf32, #tpu.memory_space<vmem>>, vector<1x1x8x1xf32>,
    return
  }
  func.func @transform_0(%arg0: i32, %arg1: i32) -> (i32, i32, i32) {
    %c0_i32 = arith.constant 0 : i32
    %c0_i32_0 = arith.constant 0 : i32
    return %arg0, %c0_i32, %arg1 : i32, i32, i32
  }
  func.func @transform_1(%arg0: i32, %arg1: i32) -> (i32, i32) {
    %c0_i32 = arith.constant 0 : i32
    %c0_i32_0 = arith.constant 0 : i32
    %c0_i32_1 = arith.constant 0 : i32
    return %c0_i32, %c0_i32_0 : i32, i32
  }
  func.func @transform_2(%arg0: i32, %arg1: i32) -> (i32, i32) {
    %c0_i32 = arith.constant 0 : i32
    %c0_i32_0 = arith.constant 0 : i32
    %c0_i32_1 = arith.constant 0 : i32
    return %c0_i32, %c0_i32_0 : i32, i32
  }
  func.func @transform_3(%arg0: i32, %arg1: i32) -> (i32, i32, i32) {
    %c0_i32 = arith.constant 0 : i32
    %c0_i32_0 = arith.constant 0 : i32
    return %arg0, %c0_i32, %arg1 : i32, i32, i32
  }
  func.func @transform_4(%arg0: i32, %arg1: i32) -> (i32, i32, i32) {
    %c0_i32 = arith.constant 0 : i32
    %c0_i32_0 = arith.constant 0 : i32
    return %arg0, %c0_i32, %arg1 : i32, i32, i32
  }
  func.func @transform_5(%arg0: i32, %arg1: i32) -> (i32, i32, i32, i32) {
    %c0_i32 = arith.constant 0 : i32
    %c0_i32_0 = arith.constant 0 : i32
    %c0_i32_1 = arith.constant 0 : i32
    return %arg0, %arg1, %c0_i32, %c0_i32_0 : i32, i32, i32, i32
  }
  func.func @transform_6(%arg0: i32, %arg1: i32) -> (i32, i32, i32, i32) {
    %c0_i32 = arith.constant 0 : i32
    %c0_i32_0 = arith.constant 0 : i32
    %c0_i32_1 = arith.constant 0 : i32
    return %arg0, %arg1, %c0_i32, %c0_i32_0 : i32, i32, i32, i32
  }
  func.func @transform_7(%arg0: i32, %arg1: i32) -> (i32, i32, i32, i32) {
    %c0_i32 = arith.constant 0 : i32
    %c0_i32_0 = arith.constant 0 : i32
    %c0_i32_1 = arith.constant 0 : i32
    return %arg0, %arg1, %c0_i32, %c0_i32_0 : i32, i32, i32, i32
  }
  func.func @transform_8(%arg0: i32, %arg1: i32) -> (i32, i32, i32, i32) {
    %c0_i32 = arith.constant 0 : i32
    %c0_i32_0 = arith.constant 0 : i32
    %c0_i32_1 = arith.constant 0 : i32
    return %arg0, %arg1, %c0_i32, %c0_i32_0 : i32, i32, i32, i32
  }
}

</mosaic_0001>

<llo_original>
// kernel: tpu_custom_call.1
$region0: #{tpu_custom_call.1}
  #allocation0 [shape = 'u32[]', space=smem, size = 0x4, offset = 0x4, fixed_abs, tag = 'smem constant byte address 0x4 - core index']
  #allocation1 [shape = 'u32[144,128]{1,0:T(1,128)}', space=vmem, size = 0x12000, scoped, tag = 'internal scratch']
  %s0 = inlined_call_operand.hbm [shape: f32[2,4,256], index: 0, kind: input, shape index: {}]
  %s1 = inlined_call_operand.vmem [shape: bf16[8,4], index: 1, kind: input, shape index: {}]
  %s2 = inlined_call_operand.vmem [shape: bf16[8,4], index: 2, kind: input, shape index: {}]
  %s3 = inlined_call_operand.hbm [shape: bf16[2,8,256], index: 3, kind: output, shape index: {0}]
  %s4 = inlined_call_operand.hbm [shape: f32[2,8,256], index: 4, kind: output, shape index: {1}]
  %s5 = inlined_call_operand.vmem [shape: f32[2,1,8,1], index: 5, kind: output, shape index: {2}]
  %s6 = inlined_call_operand.vmem [shape: f32[2,1,8,1], index: 6, kind: output, shape index: {3}]
  %s7 = inlined_call_operand.vmem [shape: f32[2,1,8,1], index: 7, kind: output, shape index: {4}]
  %s8 = inlined_call_operand.vmem [shape: f32[2,1,8,1], index: 8, kind: output, shape index: {5}]
  %9 = xla_tuple %s3, %s4, %s5, %s6, %s7, %s8
  %s10 = sld [smem:[#allocation0]]
  $region89: #{tpu_custom_call.1} parent=0
    _
  %s12 = ssub.s32 1, %s10
  %s13 = scalar_select 0, %s12, %s10
  $region1: #{tpu_custom_call.1} parent=0
    #allocation2 [shape = 'u8[8192]{0}', space=vmem, size = 0x2000, scoped, tag = 'input window, operand 0']
    #allocation3 [shape = 's32[2]{0}', space=sflag, size = 0x8, scoped, tag = 'scoped memory for tpu_custom_call.1']
    #allocation4 [shape = 's32[2]{0}', space=sflag, size = 0x8, scoped, tag = 'scoped memory for tpu_custom_call.1']
    #allocation5 [shape = 'u8[8192]{0}', space=vmem, size = 0x2000, scoped, tag = 'output window, operand 0']
    #allocation6 [shape = 'u8[16384]{0}', space=vmem, size = 0x4000, scoped, tag = 'output window, operand 1']
    #allocation7 [shape = 's32[2]{0}', space=sflag, size = 0x8, scoped, tag = 'scoped memory for tpu_custom_call.1']
    %14 = vsyncpa [#allocation3], 0
    %s15 = scalar_lea.sflag [#allocation3], 1
    %16 = vsyncpa %s15, 0
    %17 = vsyncpa [#allocation4], 0
    %s18 = scalar_lea.sflag [#allocation4], 1
    %19 = vsyncpa %s18, 0
    %20 = vsyncpa [#allocation7], 0
    %s21 = scalar_lea.sflag [#allocation7], 1
    %22 = vsyncpa %s21, 0
    loop: start=0, step=1, limit=4
    $region2: #{tpu_custom_call.1} parent=1 // loop_pre_header
      _
    $region3: #{tpu_custom_call.1} parent=1 // loop_header
      %s24 = sphi 0, %s28
      %p25 = scmp.ge.s32.totalorder %s24, 4
      %s31 = sphi 0, %s43
      %s32 = sphi 0, %s39
      %s33 = sphi 0, %s31
      %s34 = sphi 0, %s32
      %s35 = sphi 0, %s33
      %s36 = sphi 0, %s34
      %s48 = sphi 0, %s50
      %s51 = sphi 0, %s48
      %s52 = sphi 0, %s51
      %s68 = sphi 0, %s52
      %s72 = sphi 0, %s72
      %s74 = sphi 0, %s72
      %s75 = sphi 0, %s74
      %s89 = sphi 0, %s75
      %s93 = sphi 0, %s93
      %s95 = sphi 0, %s93
      %s96 = sphi 0, %s95
      %s110 = sphi 0, %s96
      %s118 = sphi 0, %s120
      %s121 = sphi 0, %s118
      %s122 = sphi 0, %s121
      %s138 = sphi 0, %s122
      %s146 = sphi 0, %s148
      %s149 = sphi 0, %s146
      %s150 = sphi 0, %s149
      %s166 = sphi 0, %s150
      %s174 = sphi 0, %s176
      %s177 = sphi 0, %s174
      %s178 = sphi 0, %s177
      %s194 = sphi 0, %s178
      %s202 = sphi 0, %s204
      %s205 = sphi 0, %s202
      %s206 = sphi 0, %s205
      %s222 = sphi 0, %s206
      %s230 = sphi 0, %s232
      %s233 = sphi 0, %s230
      %s234 = sphi 0, %s233
      %s250 = sphi 0, %s234
      %s258 = sphi 0, %s260
      %s261 = sphi 0, %s258
      %s262 = sphi 0, %s261
      %s278 = sphi 0, %s262
    $region4: #{tpu_custom_call.1} parent=1 // loop_header_branch
      %27 = sbr.rel (%p25) target = $region8
    $region5: #{tpu_custom_call.1} parent=1 // loop_body
      %s29 = ssub.s32 %s24, 1
      %s30 = ssub.s32 %s24, 2
      %s37 = sadd.s32 1, %s32
      %p38 = scmp.ge.s32.totalorder %s37, 1
      %s39 = scalar_select %p38, 0, %s37
      %s40 = sadd.s32 1, %s31
      %s41 = scalar_select %p38, %s40, %s31
      %p42 = scmp.ge.s32.totalorder %s41, 2
      %s43 = scalar_select %p42, 0, %s41
      %s44 = ssub.s32 %s31, %s43
      %s45 = ssub.s32 %s32, %s39
      %s46 = sor.u32 %s44, %s45
      %p47 = scmp.eq.s32.totalorder %s46, 0
      %s49 = sadd.s32 %s48, 1
      %s50 = scalar_select %p47, %s48, %s49
      %p53 = pneg %p47
      %p54 = scmp.eq.s32.totalorder %s24, 1
      %p55 = por %p53, %p54
      %p56 = scmp.ne.s32.totalorder %s48, %s51
      %p57 = scmp.eq.s32.totalorder %s24, 0
      %p58 = por %p56, %p57
      %p59 = scmp.ne.s32.totalorder %s48, %s51
      %p60 = scmp.eq.s32.totalorder %s29, 1
      %p61 = por %p59, %p60
      %p62 = scmp.ne.s32.totalorder %s51, %s52
      %p63 = scmp.eq.s32.totalorder %s29, 0
      %p64 = por %p62, %p63
      %p65 = scmp.ne.s32.totalorder %s51, %s52
      %p66 = scmp.eq.s32.totalorder %s30, 1
      %p67 = por %p65, %p66
      %p69 = scmp.ne.s32.totalorder %s52, %s68
      %p70 = scmp.eq.s32.totalorder %s30, 0
      %p71 = por %p69, %p70
      %s73 = sadd.s32 %s72, 1
      %p76 = scmp.eq.s32.totalorder %s24, 1
      %p77 = scmp.ne.s32.totalorder %s72, %s74
      %p78 = scmp.eq.s32.totalorder %s24, 0
      %p79 = por %p77, %p78
      %p80 = scmp.ne.s32.totalorder %s72, %s74
      %p81 = scmp.eq.s32.totalorder %s29, 1
      %p82 = por %p80, %p81
      %p83 = scmp.ne.s32.totalorder %s74, %s75
      %p84 = scmp.eq.s32.totalorder %s29, 0
      %p85 = por %p83, %p84
      %p86 = scmp.ne.s32.totalorder %s74, %s75
      %p87 = scmp.eq.s32.totalorder %s30, 1
      %p88 = por %p86, %p87
      %p90 = scmp.ne.s32.totalorder %s75, %s89
      %p91 = scmp.eq.s32.totalorder %s30, 0
      %p92 = por %p90, %p91
      %s94 = sadd.s32 %s93, 1
      %p97 = scmp.eq.s32.totalorder %s24, 1
      %p98 = scmp.ne.s32.totalorder %s93, %s95
      %p99 = scmp.eq.s32.totalorder %s24, 0
      %p100 = por %p98, %p99
      %p101 = scmp.ne.s32.totalorder %s93, %s95
      %p102 = scmp.eq.s32.totalorder %s29, 1
      %p103 = por %p101, %p102
      %p104 = scmp.ne.s32.totalorder %s95, %s96
      %p105 = scmp.eq.s32.totalorder %s29, 0
      %p106 = por %p104, %p105
      %p107 = scmp.ne.s32.totalorder %s95, %s96
      %p108 = scmp.eq.s32.totalorder %s30, 1
      %p109 = por %p107, %p108
      %p111 = scmp.ne.s32.totalorder %s96, %s110
      %p112 = scmp.eq.s32.totalorder %s30, 0
      %p113 = por %p111, %p112
      %s114 = ssub.s32 %s31, %s43
      %s115 = ssub.s32 %s32, %s39
      %s116 = sor.u32 %s114, %s115
      %p117 = scmp.eq.s32.totalorder %s116, 0
      %s119 = sadd.s32 %s118, 1
      %s120 = scalar_select %p117, %s118, %s119
      %p123 = pneg %p117
      %p124 = scmp.eq.s32.totalorder %s24, 1
      %p125 = por %p123, %p124
      %p126 = scmp.ne.s32.totalorder %s118, %s121
      %p127 = scmp.eq.s32.totalorder %s24, 0
      %p128 = por %p126, %p127
      %p129 = scmp.ne.s32.totalorder %s118, %s121
      %p130 = scmp.eq.s32.totalorder %s29, 1
      %p131 = por %p129, %p130
      %p132 = scmp.ne.s32.totalorder %s121, %s122
      %p133 = scmp.eq.s32.totalorder %s29, 0
      %p134 = por %p132, %p133
      %p135 = scmp.ne.s32.totalorder %s121, %s122
      %p136 = scmp.eq.s32.totalorder %s30, 1
      %p137 = por %p135, %p136
      %p139 = scmp.ne.s32.totalorder %s122, %s138
      %p140 = scmp.eq.s32.totalorder %s30, 0
      %p141 = por %p139, %p140
      %s142 = ssub.s32 %s31, %s43
      %s143 = ssub.s32 %s32, %s39
      %s144 = sor.u32 %s142, %s143
      %p145 = scmp.eq.s32.totalorder %s144, 0
      %s147 = sadd.s32 %s146, 1
      %s148 = scalar_select %p145, %s146, %s147
      %p151 = pneg %p145
      %p152 = scmp.eq.s32.totalorder %s24, 1
      %p153 = por %p151, %p152
      %p154 = scmp.ne.s32.totalorder %s146, %s149
      %p155 = scmp.eq.s32.totalorder %s24, 0
      %p156 = por %p154, %p155
      %p157 = scmp.ne.s32.totalorder %s146, %s149
      %p158 = scmp.eq.s32.totalorder %s29, 1
      %p159 = por %p157, %p158
      %p160 = scmp.ne.s32.totalorder %s149, %s150
      %p161 = scmp.eq.s32.totalorder %s29, 0
      %p162 = por %p160, %p161
      %p163 = scmp.ne.s32.totalorder %s149, %s150
      %p164 = scmp.eq.s32.totalorder %s30, 1
      %p165 = por %p163, %p164
      %p167 = scmp.ne.s32.totalorder %s150, %s166
      %p168 = scmp.eq.s32.totalorder %s30, 0
      %p169 = por %p167, %p168
      %s170 = ssub.s32 %s31, %s43
      %s171 = ssub.s32 %s32, %s39
      %s172 = sor.u32 %s170, %s171
      %p173 = scmp.eq.s32.totalorder %s172, 0
      %s175 = sadd.s32 %s174, 1
      %s176 = scalar_select %p173, %s174, %s175
      %p179 = pneg %p173
      %p180 = scmp.eq.s32.totalorder %s24, 1
      %p181 = por %p179, %p180
      %p182 = scmp.ne.s32.totalorder %s174, %s177
      %p183 = scmp.eq.s32.totalorder %s24, 0
      %p184 = por %p182, %p183
      %p185 = scmp.ne.s32.totalorder %s174, %s177
      %p186 = scmp.eq.s32.totalorder %s29, 1
      %p187 = por %p185, %p186
      %p188 = scmp.ne.s32.totalorder %s177, %s178
      %p189 = scmp.eq.s32.totalorder %s29, 0
      %p190 = por %p188, %p189
      %p191 = scmp.ne.s32.totalorder %s177, %s178
      %p192 = scmp.eq.s32.totalorder %s30, 1
      %p193 = por %p191, %p192
      %p195 = scmp.ne.s32.totalorder %s178, %s194
      %p196 = scmp.eq.s32.totalorder %s30, 0
      %p197 = por %p195, %p196
      %s198 = ssub.s32 %s31, %s43
      %s199 = ssub.s32 %s32, %s39
      %s200 = sor.u32 %s198, %s199
      %p201 = scmp.eq.s32.totalorder %s200, 0
      %s203 = sadd.s32 %s202, 1
      %s204 = scalar_select %p201, %s202, %s203
      %p207 = pneg %p201
      %p208 = scmp.eq.s32.totalorder %s24, 1
      %p209 = por %p207, %p208
      %p210 = scmp.ne.s32.totalorder %s202, %s205
      %p211 = scmp.eq.s32.totalorder %s24, 0
      %p212 = por %p210, %p211
      %p213 = scmp.ne.s32.totalorder %s202, %s205
      %p214 = scmp.eq.s32.totalorder %s29, 1
      %p215 = por %p213, %p214
      %p216 = scmp.ne.s32.totalorder %s205, %s206
      %p217 = scmp.eq.s32.totalorder %s29, 0
      %p218 = por %p216, %p217
      %p219 = scmp.ne.s32.totalorder %s205, %s206
      %p220 = scmp.eq.s32.totalorder %s30, 1
      %p221 = por %p219, %p220
      %p223 = scmp.ne.s32.totalorder %s206, %s222
      %p224 = scmp.eq.s32.totalorder %s30, 0
      %p225 = por %p223, %p224
      %s226 = ssub.s32 %s31, %s43
      %s227 = ssub.s32 %s32, %s39
      %s228 = sor.u32 %s226, %s227
      %p229 = scmp.eq.s32.totalorder %s228, 0
      %s231 = sadd.s32 %s230, 1
      %s232 = scalar_select %p229, %s230, %s231
      %p235 = pneg %p229
      %p236 = scmp.eq.s32.totalorder %s24, 1
      %p237 = por %p235, %p236
      %p238 = scmp.ne.s32.totalorder %s230, %s233
      %p239 = scmp.eq.s32.totalorder %s24, 0
      %p240 = por %p238, %p239
      %p241 = scmp.ne.s32.totalorder %s230, %s233
      %p242 = scmp.eq.s32.totalorder %s29, 1
      %p243 = por %p241, %p242
      %p244 = scmp.ne.s32.totalorder %s233, %s234
      %p245 = scmp.eq.s32.totalorder %s29, 0
      %p246 = por %p244, %p245
      %p247 = scmp.ne.s32.totalorder %s233, %s234
      %p248 = scmp.eq.s32.totalorder %s30, 1
      %p249 = por %p247, %p248
      %p251 = scmp.ne.s32.totalorder %s234, %s250
      %p252 = scmp.eq.s32.totalorder %s30, 0
      %p253 = por %p251, %p252
      %s254 = ssub.s32 %s31, %s43
      %s255 = ssub.s32 %s32, %s39
      %s256 = sor.u32 %s254, %s255
      %p257 = scmp.eq.s32.totalorder %s256, 0
      %s259 = sadd.s32 %s258, 1
      %s260 = scalar_select %p257, %s258, %s259
      %p263 = pneg %p257
      %p264 = scmp.eq.s32.totalorder %s24, 1
      %p265 = por %p263, %p264
      %p266 = scmp.ne.s32.totalorder %s258, %s261
      %p267 = scmp.eq.s32.totalorder %s24, 0
      %p268 = por %p266, %p267
      %p269 = scmp.ne.s32.totalorder %s258, %s261
      %p270 = scmp.eq.s32.totalorder %s29, 1
      %p271 = por %p269, %p270
      %p272 = scmp.ne.s32.totalorder %s261, %s262
      %p273 = scmp.eq.s32.totalorder %s29, 0
      %p274 = por %p272, %p273
      %p275 = scmp.ne.s32.totalorder %s261, %s262
      %p276 = scmp.eq.s32.totalorder %s30, 1
      %p277 = por %p275, %p276
      %p279 = scmp.ne.s32.totalorder %s262, %s278
      %p280 = scmp.eq.s32.totalorder %s30, 0
      %p281 = por %p279, %p280
      %p282 = scmp.le.s32.totalorder 1, %s24
      %p283 = scmp.lt.s32.totalorder %s24, 3
      %p284 = pnand %p282, %p283
      %p285 = pneg %p284
      // Predicated region
      $region9: #{tpu_custom_call.1} parent=5 // pred_check
        _
      $region10: #{tpu_custom_call.1} parent=5 // pred_check_branch
        %287 = sbr.rel (%p284) target = $region12
      $region11: #{tpu_custom_call.1} parent=5 // pred_region
        %s288 = ssub.s32 %s24, 1
        // Predicated region
        $region13: #{tpu_custom_call.1} parent=11 // pred_check
          %p289 = pneg %p85
        $region14: #{tpu_custom_call.1} parent=11 // pred_check_branch
          %291 = sbr.rel (%p289) target = $region16
        $region15: #{tpu_custom_call.1} parent=11 // pred_region
          _
        $region16: #{tpu_custom_call.1} parent=11 // pred_fallthru
          _
        // Predicated region
        $region17: #{tpu_custom_call.1} parent=11 // pred_check
          %p292 = pneg %p106
        $region18: #{tpu_custom_call.1} parent=11 // pred_check_branch
          %294 = sbr.rel (%p292) target = $region20
        $region19: #{tpu_custom_call.1} parent=11 // pred_region
          _
        $region20: #{tpu_custom_call.1} parent=11 // pred_fallthru
          _
      $region12: #{tpu_custom_call.1} parent=5 // pred_fallthru
        _
      %p295 = scmp.lt.s32.totalorder %s24, 2
      // Predicated region
      $region21: #{tpu_custom_call.1} parent=5 // pred_check
        %p296 = pneg %p295
      $region22: #{tpu_custom_call.1} parent=5 // pred_check_branch
        %298 = sbr.rel (%p296) target = $region24
      $region23: #{tpu_custom_call.1} parent=5 // pred_region
        // Predicated region
        $region25: #{tpu_custom_call.1} parent=23 // pred_check
          %p299 = pneg %p58
        $region26: #{tpu_custom_call.1} parent=23 // pred_check_branch
          %301 = sbr.rel (%p299) target = $region28
        $region27: #{tpu_custom_call.1} parent=23 // pred_region
          %s302 = sand.u32 %s48, 1
          %s303 = scalar_lea.sflag [#allocation3], %s302
          %s304 = sand.u32 %s48, 1
          %s305 = smul.addr %s304, 8
          %s306 = scalar_lea.vmem [#allocation2], %s305
          %s307 = smul.u32 2, %s32
          %s309 = ssub.s32 128, 128
          %310 = vsyncadd %s303, %s309
          %s311 = smul.addr %s31, 2
          %s312 = sadd.s32 %s307, %s311
          %s313 = smul.addr %s312, 64
          %s314 = scalar_lea.hbm %s0, %s313
          %s316 = sshll.u32 %s306, 4
          %s317 = int_to_ptr.vmem [resolvable:$true] %s316
          %319 = dma.hbm_to_vmem [thread:$0]  %s314, 128, %s317, %s303
        $region28: #{tpu_custom_call.1} parent=23 // pred_fallthru
          _
      $region24: #{tpu_custom_call.1} parent=5 // pred_fallthru
        _
      %p320 = scmp.le.s32.totalorder 1, %s24
      %p321 = scmp.lt.s32.totalorder %s24, 3
      %p322 = pnand %p320, %p321
      %p323 = pneg %p322
      // Predicated region
      $region29: #{tpu_custom_call.1} parent=5 // pred_check
        _
      $region30: #{tpu_custom_call.1} parent=5 // pred_check_branch
        %325 = sbr.rel (%p322) target = $region32
      $region31: #{tpu_custom_call.1} parent=5 // pred_region
        %s326 = ssub.s32 %s24, 1
        %s327 = sand.u32 %s51, 1
        %s328 = scalar_lea.sflag [#allocation3], %s327
        %s329 = sand.u32 %s51, 1
        %s330 = smul.addr %s329, 8
        %s331 = scalar_lea.vmem [#allocation2], %s330
        // Predicated region
        $region33: #{tpu_custom_call.1} parent=31 // pred_check
          %p332 = pneg %p64
        $region34: #{tpu_custom_call.1} parent=31 // pred_check_branch
          %334 = sbr.rel (%p332) target = $region36
        $region35: #{tpu_custom_call.1} parent=31 // pred_region
          %335 = dma.done %s328, 128
        $region36: #{tpu_custom_call.1} parent=31 // pred_fallthru
          _
        %s336 = sand.u32 %s51, 1
        %s337 = scalar_lea.sflag [#allocation3], %s336
        %s338 = sand.u32 %s51, 1
        %s339 = smul.addr %s338, 8
        %s340 = scalar_lea.vmem [#allocation2], %s339
        %p341 = pneg %p64
        %p342 = pneg %p61
        %p343 = pneg %p85
        %p344 = pneg %p82
        %p345 = pneg %p106
        %p346 = pneg %p103
        %p347 = pneg %p134
        %p348 = pneg %p131
        %s349 = sand.u32 %s121, 1
        %s350 = scalar_lea.sflag [#allocation4], %s349
        %s351 = sand.u32 %s121, 1
        %s352 = smul.addr %s351, 8
        %s353 = scalar_lea.vmem [#allocation5], %s352
        %p354 = pneg %p162
        %p355 = pneg %p159
        %s356 = sand.u32 %s149, 1
        %s357 = scalar_lea.sflag [#allocation7], %s356
        %s358 = sand.u32 %s149, 1
        %s359 = smul.addr %s358, 16
        %s360 = scalar_lea.vmem [#allocation6], %s359
        %p361 = pneg %p190
        %p362 = pneg %p187
        %p363 = scmp.lt.s32.totalorder %s33, 1
        %s364 = scalar_select %p363, %s33, 1
        %p365 = scmp.lt.s32.totalorder %s34, 0
        %s366 = scalar_select %p365, %s34, 0
        %s367 = sadd.s32 %s366, %s364
        %s368 = smul.addr %s367, 8
        %s369 = scalar_lea.vmem %s5, %s368
        %p370 = pneg %p218
        %p371 = pneg %p215
        %p372 = scmp.lt.s32.totalorder %s33, 1
        %s373 = scalar_select %p372, %s33, 1
        %p374 = scmp.lt.s32.totalorder %s34, 0
        %s375 = scalar_select %p374, %s34, 0
        %s376 = sadd.s32 %s375, %s373
        %s377 = smul.addr %s376, 8
        %s378 = scalar_lea.vmem %s6, %s377
        %p379 = pneg %p246
        %p380 = pneg %p243
        %p381 = scmp.lt.s32.totalorder %s33, 1
        %s382 = scalar_select %p381, %s33, 1
        %p383 = scmp.lt.s32.totalorder %s34, 0
        %s384 = scalar_select %p383, %s34, 0
        %s385 = sadd.s32 %s384, %s382
        %s386 = smul.addr %s385, 8
        %s387 = scalar_lea.vmem %s7, %s386
        %p388 = pneg %p274
        %p389 = pneg %p271
        %p390 = scmp.lt.s32.totalorder %s33, 1
        %s391 = scalar_select %p390, %s33, 1
        %p392 = scmp.lt.s32.totalorder %s34, 0
        %s393 = scalar_select %p392, %s34, 0
        %s394 = sadd.s32 %s393, %s391
        %s395 = smul.addr %s394, 8
        %s396 = scalar_lea.vmem %s8, %s395
        %s397 = smul.u32 2, %s34
        %s398 = smul.u32 2, %s34
        %s399 = smul.u32 2, %s34
        %p400 = scmp.lt.s32.totalorder %s33, 1
        %s401 = scalar_select %p400, %s33, 1
        %p402 = scmp.lt.s32.totalorder %s34, 0
        %s403 = scalar_select %p402, %s34, 0
        %s404 = sadd.s32 %s403, %s401
        %s405 = smul.addr %s404, 8
        %s406 = scalar_lea.vmem %s5, %s405
        %p407 = scmp.lt.s32.totalorder %s33, 1
        %s408 = scalar_select %p407, %s33, 1
        %p409 = scmp.lt.s32.totalorder %s34, 0
        %s410 = scalar_select %p409, %s34, 0
        %s411 = sadd.s32 %s410, %s408
        %s412 = smul.addr %s411, 8
        %s413 = scalar_lea.vmem %s6, %s412
        %p414 = scmp.lt.s32.totalorder %s33, 1
        %s415 = scalar_select %p414, %s33, 1
        %p416 = scmp.lt.s32.totalorder %s34, 0
        %s417 = scalar_select %p416, %s34, 0
        %s418 = sadd.s32 %s417, %s415
        %s419 = smul.addr %s418, 8
        %s420 = scalar_lea.vmem %s7, %s419
        %p421 = scmp.lt.s32.totalorder %s33, 1
        %s422 = scalar_select %p421, %s33, 1
        %p423 = scmp.lt.s32.totalorder %s34, 0
        %s424 = scalar_select %p423, %s34, 0
        %s425 = sadd.s32 %s424, %s422
        %s426 = smul.addr %s425, 8
        %s427 = scalar_lea.vmem %s8, %s426
        %v429 = vld [vmem:[%s331] sm:$0xff]
        %v431 = vcombine.high %v429, %v429
        %v433 = vpack.c.bf16 %v429, %v429
        %v434 = vpack.c.bf16 %v431, %v431
        %v435 = vld [vmem:[%s1] sm:$0xf]
        %vm436 = vcmask 31744
        %v438 = vsel %vm436, %v435, 0
        %vm440 = vcmask 1041408
        %v442 = vsel %vm440, %v433, 0
        %v445 = vsel %vm440, %v434, 0
        %447 = vmatprep.subr.bf16.mxu0 %v445
        %448 = vmatpush1.bf16.msra.mxu0 %v442
        %449 = vmatprep.subr.bf16.mxu0 0
        %450 = vmatpush1.bf16.msra.mxu0 0
        %451 = vmatprep.subr.bf16.mxu0 0
        %452 = vmatpush1.bf16.msra.mxu0 0
        %453 = vmatprep.subr.bf16.mxu0 0
        %454 = vmatpush1.bf16.msra.mxu0 0
        %455 = vmatprep.subr.bf16.mxu0 0
        %456 = vmatpush1.bf16.msra.mxu0 0
        %457 = vmatprep.subr.bf16.mxu0 0
        %458 = vmatpush1.bf16.msra.mxu0 0
        %459 = vmatprep.subr.bf16.mxu0 0
        %460 = vmatpush1.bf16.msra.mxu0 0
        %461 = vmatprep.subr.bf16.mxu0 0
        %462 = vmatpush1.bf16.msra.mxu0 0
        %463 = vmatprep.subr.bf16.mxu0 0
        %464 = vmatpush1.bf16.msra.mxu0 0
        %465 = vmatprep.subr.bf16.mxu0 0
        %466 = vmatpush1.bf16.msra.mxu0 0
        %467 = vmatprep.subr.bf16.mxu0 0
        %468 = vmatpush1.bf16.msra.mxu0 0
        %469 = vmatprep.subr.bf16.mxu0 0
        %470 = vmatpush1.bf16.msra.mxu0 0
        %471 = vmatprep.subr.bf16.mxu0 0
        %472 = vmatpush1.bf16.msra.mxu0 0
        %473 = vmatprep.subr.bf16.mxu0 0
        %474 = vmatpush1.bf16.msra.mxu0 0
        %475 = vmatprep.subr.bf16.mxu0 0
        %476 = vmatpush1.bf16.msra.mxu0 0
        %477 = vmatprep.subr.bf16.mxu0 0
        %478 = vmatpush1.bf16.msra.mxu0 0
        %479 = vmatprep.mubr.bf16.mxu0 0
        %480 = vmatmul.mubr.bf16.gmra.mrb[0].mxu0 %v438
        %v481 = vpop.f32.mrb[0].mxu0
        %v482 = vadd.f32 0.0, %v481
        %v483 = vpop.f32.mrb[0].mxu0
        %v484 = vadd.f32 0.0, %v483
        %v485 = vpop.f32.mrb[0].mxu0
        %v486 = vpop.f32.mrb[0].mxu0
        %487 = vdwg.mxu0
        %v488 = vpack.c.bf16 %v482, %v482
        %v489 = vpack.c.bf16 %v484, %v484
        %v492 = vunpack.c.l.b16 %v488
        %v493 = vunpack.c.l.b16 %v489
        %v494 = vpack.c.b16 %v493, %v492
        %496 = vst [vmem:[%s353] sm:$0xff] %v494
        %v497 = vadd.f32 %v482, %v484
        %498 = vadd.xlane.f32.xlu0 %v497
        %v499 = vpop.xlane.xlu0 %498
        %vm500 = vcmask 7168
        %501 = vst.msk [vmem:[%s406] sm:$0xff] %vm500, %v499
        %v502 = vmul.f32 %v482, %v482
        %v503 = vmul.f32 %v484, %v484
        %v504 = vadd.f32 %v502, %v503
        %505 = vadd.xlane.f32.xlu0 %v504
        %v506 = vpop.xlane.xlu0 %505
        %507 = vst.msk [vmem:[%s413] sm:$0xff] %vm500, %v506
        %v508 = vld [vmem:[%s2] sm:$0xf]
        %v510 = vsel %vm436, %v508, 0
        %512 = vmatprep.subr.bf16.mxu0 %v445
        %513 = vmatpush1.bf16.msra.mxu0 %v442
        %514 = vmatprep.subr.bf16.mxu0 0
        %515 = vmatpush1.bf16.msra.mxu0 0
        %516 = vmatprep.subr.bf16.mxu0 0
        %517 = vmatpush1.bf16.msra.mxu0 0
        %518 = vmatprep.subr.bf16.mxu0 0
        %519 = vmatpush1.bf16.msra.mxu0 0
        %520 = vmatprep.subr.bf16.mxu0 0
        %521 = vmatpush1.bf16.msra.mxu0 0
        %522 = vmatprep.subr.bf16.mxu0 0
        %523 = vmatpush1.bf16.msra.mxu0 0
        %524 = vmatprep.subr.bf16.mxu0 0
        %525 = vmatpush1.bf16.msra.mxu0 0
        %526 = vmatprep.subr.bf16.mxu0 0
        %527 = vmatpush1.bf16.msra.mxu0 0
        %528 = vmatprep.subr.bf16.mxu0 0
        %529 = vmatpush1.bf16.msra.mxu0 0
        %530 = vmatprep.subr.bf16.mxu0 0
        %531 = vmatpush1.bf16.msra.mxu0 0
        %532 = vmatprep.subr.bf16.mxu0 0
        %533 = vmatpush1.bf16.msra.mxu0 0
        %534 = vmatprep.subr.bf16.mxu0 0
        %535 = vmatpush1.bf16.msra.mxu0 0
        %536 = vmatprep.subr.bf16.mxu0 0
        %537 = vmatpush1.bf16.msra.mxu0 0
        %538 = vmatprep.subr.bf16.mxu0 0
        %539 = vmatpush1.bf16.msra.mxu0 0
        %540 = vmatprep.subr.bf16.mxu0 0
        %541 = vmatpush1.bf16.msra.mxu0 0
        %542 = vmatprep.subr.bf16.mxu0 0
        %543 = vmatpush1.bf16.msra.mxu0 0
        %544 = vmatprep.mubr.bf16.mxu0 0
        %545 = vmatmul.mubr.bf16.gmra.mrb[0].mxu0 %v510
        %v546 = vpop.f32.mrb[0].mxu0
        %v547 = vadd.f32 0.0, %v546
        %v548 = vpop.f32.mrb[0].mxu0
        %v549 = vadd.f32 0.0, %v548
        %v550 = vpop.f32.mrb[0].mxu0
        %v551 = vpop.f32.mrb[0].mxu0
        %552 = vdwg.mxu0
        %553 = vst [vmem:[%s360] sm:$0xff] %v547
        %554 = vst [vmem:[%s360 + $0x8] sm:$0xff] %v549
        %v555 = vadd.f32 %v547, %v549
        %556 = vadd.xlane.f32.xlu0 %v555
        %v557 = vpop.xlane.xlu0 %556
        %558 = vst.msk [vmem:[%s420] sm:$0xff] %vm500, %v557
        %v559 = vmul.f32 %v547, %v547
        %v560 = vmul.f32 %v549, %v549
        %v561 = vadd.f32 %v559, %v560
        %562 = vadd.xlane.f32.xlu0 %v561
        %v563 = vpop.xlane.xlu0 %562
        %564 = vst.msk [vmem:[%s427] sm:$0xff] %vm500, %v563
        %s565 = sand.u32 %s121, 1
        %s566 = scalar_lea.sflag [#allocation4], %s565
        %s567 = sand.u32 %s121, 1
        %s568 = smul.addr %s567, 8
        %s569 = scalar_lea.vmem [#allocation5], %s568
        %s570 = sand.u32 %s149, 1
        %s571 = scalar_lea.sflag [#allocation7], %s570
        %s572 = sand.u32 %s149, 1
        %s573 = smul.addr %s572, 16
        %s574 = scalar_lea.vmem [#allocation6], %s573
        %p575 = scmp.lt.s32.totalorder %s33, 1
        %s576 = scalar_select %p575, %s33, 1
        %p577 = scmp.lt.s32.totalorder %s34, 0
        %s578 = scalar_select %p577, %s34, 0
        %s579 = sadd.s32 %s578, %s576
        %s580 = smul.addr %s579, 8
        %s581 = scalar_lea.vmem %s5, %s580
        %p582 = scmp.lt.s32.totalorder %s33, 1
        %s583 = scalar_select %p582, %s33, 1
        %p584 = scmp.lt.s32.totalorder %s34, 0
        %s585 = scalar_select %p584, %s34, 0
        %s586 = sadd.s32 %s585, %s583
        %s587 = smul.addr %s586, 8
        %s588 = scalar_lea.vmem %s6, %s587
        %p589 = scmp.lt.s32.totalorder %s33, 1
        %s590 = scalar_select %p589, %s33, 1
        %p591 = scmp.lt.s32.totalorder %s34, 0
        %s592 = scalar_select %p591, %s34, 0
        %s593 = sadd.s32 %s592, %s590
        %s594 = smul.addr %s593, 8
        %s595 = scalar_lea.vmem %s7, %s594
        %p596 = scmp.lt.s32.totalorder %s33, 1
        %s597 = scalar_select %p596, %s33, 1
        %p598 = scmp.lt.s32.totalorder %s34, 0
        %s599 = scalar_select %p598, %s34, 0
        %s600 = sadd.s32 %s599, %s597
        %s601 = smul.addr %s600, 8
        %s602 = scalar_lea.vmem %s8, %s601
        // Predicated region
        $region37: #{tpu_custom_call.1} parent=31 // pred_check
          %p603 = pneg %p131
        $region38: #{tpu_custom_call.1} parent=31 // pred_check_branch
          %605 = sbr.rel (%p603) target = $region40
        $region39: #{tpu_custom_call.1} parent=31 // pred_region
          %s606 = smul.u32 2, %s34
          %s608 = ssub.s32 128, 128
          %609 = vsyncadd %s566, %s608
          %s610 = smul.addr %s33, 2
          %s611 = sadd.s32 %s606, %s610
          %s612 = smul.addr %s611, 64
          %s613 = scalar_lea.hbm %s3, %s612
          %s615 = sshll.u32 %s569, 4
          %s616 = int_to_ptr.vmem [resolvable:$true] %s615
          %618 = dma.vmem_to_hbm [thread:$0]  %s616, 128, %s613, %s566
        $region40: #{tpu_custom_call.1} parent=31 // pred_fallthru
          _
        // Predicated region
        $region41: #{tpu_custom_call.1} parent=31 // pred_check
          %p619 = pneg %p159
        $region42: #{tpu_custom_call.1} parent=31 // pred_check_branch
          %621 = sbr.rel (%p619) target = $region44
        $region43: #{tpu_custom_call.1} parent=31 // pred_region
          %s622 = smul.u32 2, %s34
          %s624 = ssub.s32 256, 256
          %625 = vsyncadd %s571, %s624
          %s626 = smul.addr %s33, 2
          %s627 = sadd.s32 %s622, %s626
          %s628 = smul.addr %s627, 128
          %s629 = scalar_lea.hbm %s4, %s628
          %s631 = sshll.u32 %s574, 4
          %s632 = int_to_ptr.vmem [resolvable:$true] %s631
          %634 = dma.vmem_to_hbm [thread:$0]  %s632, 256, %s629, %s571
        $region44: #{tpu_custom_call.1} parent=31 // pred_fallthru
          _
        // Predicated region
        $region45: #{tpu_custom_call.1} parent=31 // pred_check
          %p635 = pneg %p187
        $region46: #{tpu_custom_call.1} parent=31 // pred_check_branch
          %637 = sbr.rel (%p635) target = $region48
        $region47: #{tpu_custom_call.1} parent=31 // pred_region
          _
        $region48: #{tpu_custom_call.1} parent=31 // pred_fallthru
          _
        // Predicated region
        $region49: #{tpu_custom_call.1} parent=31 // pred_check
          %p638 = pneg %p215
        $region50: #{tpu_custom_call.1} parent=31 // pred_check_branch
          %640 = sbr.rel (%p638) target = $region52
        $region51: #{tpu_custom_call.1} parent=31 // pred_region
          _
        $region52: #{tpu_custom_call.1} parent=31 // pred_fallthru
          _
        // Predicated region
        $region53: #{tpu_custom_call.1} parent=31 // pred_check
          %p641 = pneg %p243
        $region54: #{tpu_custom_call.1} parent=31 // pred_check_branch
          %643 = sbr.rel (%p641) target = $region56
        $region55: #{tpu_custom_call.1} parent=31 // pred_region
          _
        $region56: #{tpu_custom_call.1} parent=31 // pred_fallthru
          _
        // Predicated region
        $region57: #{tpu_custom_call.1} parent=31 // pred_check
          %p644 = pneg %p271
        $region58: #{tpu_custom_call.1} parent=31 // pred_check_branch
          %646 = sbr.rel (%p644) target = $region60
        $region59: #{tpu_custom_call.1} parent=31 // pred_region
          _
        $region60: #{tpu_custom_call.1} parent=31 // pred_fallthru
          _
      $region32: #{tpu_custom_call.1} parent=5 // pred_fallthru
        _
      %p647 = scmp.le.s32.totalorder 2, %s24
      // Predicated region
      $region61: #{tpu_custom_call.1} parent=5 // pred_check
        %p648 = pneg %p647
      $region62: #{tpu_custom_call.1} parent=5 // pred_check_branch
        %650 = sbr.rel (%p648) target = $region64
      $region63: #{tpu_custom_call.1} parent=5 // pred_region
        %s651 = ssub.s32 %s24, 2
        // Predicated region
        $region65: #{tpu_custom_call.1} parent=63 // pred_check
          %p652 = pneg %p137
        $region66: #{tpu_custom_call.1} parent=63 // pred_check_branch
          %654 = sbr.rel (%p652) target = $region68
        $region67: #{tpu_custom_call.1} parent=63 // pred_region
          %s655 = sand.u32 %s122, 1
          %s656 = scalar_lea.sflag [#allocation4], %s655
          %s657 = sand.u32 %s122, 1
          %s658 = smul.addr %s657, 8
          %s659 = scalar_lea.vmem [#allocation5], %s658
          %660 = dma.done %s656, 128
        $region68: #{tpu_custom_call.1} parent=63 // pred_fallthru
          _
        // Predicated region
        $region69: #{tpu_custom_call.1} parent=63 // pred_check
          %p661 = pneg %p165
        $region70: #{tpu_custom_call.1} parent=63 // pred_check_branch
          %663 = sbr.rel (%p661) target = $region72
        $region71: #{tpu_custom_call.1} parent=63 // pred_region
          %s664 = sand.u32 %s150, 1
          %s665 = scalar_lea.sflag [#allocation7], %s664
          %s666 = sand.u32 %s150, 1
          %s667 = smul.addr %s666, 16
          %s668 = scalar_lea.vmem [#allocation6], %s667
          %669 = dma.done %s665, 256
        $region72: #{tpu_custom_call.1} parent=63 // pred_fallthru
          _
        // Predicated region
        $region73: #{tpu_custom_call.1} parent=63 // pred_check
          %p670 = pneg %p193
        $region74: #{tpu_custom_call.1} parent=63 // pred_check_branch
          %672 = sbr.rel (%p670) target = $region76
        $region75: #{tpu_custom_call.1} parent=63 // pred_region
          %p673 = scmp.lt.s32.totalorder %s35, 1
          %s674 = scalar_select %p673, %s35, 1
          %p675 = scmp.lt.s32.totalorder %s36, 0
          %s676 = scalar_select %p675, %s36, 0
          %s677 = sadd.s32 %s676, %s674
          %s678 = smul.addr %s677, 8
          %s679 = scalar_lea.vmem %s5, %s678
        $region76: #{tpu_custom_call.1} parent=63 // pred_fallthru
          _
        // Predicated region
        $region77: #{tpu_custom_call.1} parent=63 // pred_check
          %p680 = pneg %p221
        $region78: #{tpu_custom_call.1} parent=63 // pred_check_branch
          %682 = sbr.rel (%p680) target = $region80
        $region79: #{tpu_custom_call.1} parent=63 // pred_region
          %p683 = scmp.lt.s32.totalorder %s35, 1
          %s684 = scalar_select %p683, %s35, 1
          %p685 = scmp.lt.s32.totalorder %s36, 0
          %s686 = scalar_select %p685, %s36, 0
          %s687 = sadd.s32 %s686, %s684
          %s688 = smul.addr %s687, 8
          %s689 = scalar_lea.vmem %s6, %s688
        $region80: #{tpu_custom_call.1} parent=63 // pred_fallthru
          _
        // Predicated region
        $region81: #{tpu_custom_call.1} parent=63 // pred_check
          %p690 = pneg %p249
        $region82: #{tpu_custom_call.1} parent=63 // pred_check_branch
          %692 = sbr.rel (%p690) target = $region84
        $region83: #{tpu_custom_call.1} parent=63 // pred_region
          %p693 = scmp.lt.s32.totalorder %s35, 1
          %s694 = scalar_select %p693, %s35, 1
          %p695 = scmp.lt.s32.totalorder %s36, 0
          %s696 = scalar_select %p695, %s36, 0
          %s697 = sadd.s32 %s696, %s694
          %s698 = smul.addr %s697, 8
          %s699 = scalar_lea.vmem %s7, %s698
        $region84: #{tpu_custom_call.1} parent=63 // pred_fallthru
          _
        // Predicated region
        $region85: #{tpu_custom_call.1} parent=63 // pred_check
          %p700 = pneg %p277
        $region86: #{tpu_custom_call.1} parent=63 // pred_check_branch
          %702 = sbr.rel (%p700) target = $region88
        $region87: #{tpu_custom_call.1} parent=63 // pred_region
          %p703 = scmp.lt.s32.totalorder %s35, 1
          %s704 = scalar_select %p703, %s35, 1
          %p705 = scmp.lt.s32.totalorder %s36, 0
          %s706 = scalar_select %p705, %s36, 0
          %s707 = sadd.s32 %s706, %s704
          %s708 = smul.addr %s707, 8
          %s709 = scalar_lea.vmem %s8, %s708
        $region88: #{tpu_custom_call.1} parent=63 // pred_fallthru
          _
      $region64: #{tpu_custom_call.1} parent=5 // pred_fallthru
        _
    $region6: #{tpu_custom_call.1} parent=1 // loop_footer
      %s28 = sadd.s32 1, %s24
    $region7: #{tpu_custom_call.1} parent=1 // loop_footer_branch
      %23 = sbr.rel target = $region3
    $region8: #{tpu_custom_call.1} parent=1 // loop_exit
      _
    %710 = vsyncpa [#allocation3], 1
    %s711 = scalar_lea.sflag [#allocation3], 1
    %712 = vsyncpa %s711, 1
    %713 = vsyncpa [#allocation4], 1
    %s714 = scalar_lea.sflag [#allocation4], 1
    %715 = vsyncpa %s714, 1
    %716 = vsyncpa [#allocation7], 1
    %s717 = scalar_lea.sflag [#allocation7], 1
    %718 = vsyncpa %s717, 1

</llo_original>
